<compile_context>
chip_gen: v6e
topology: v6e:2x2x1
jax: 0.10.0
libtpu: 0.0.40
codegen_flags: <defaults>
</compile_context>

<pallas_src>
import functools

import jax
import jax.numpy as jnp
from jax.experimental import pallas as pl
from jax.experimental.pallas import tpu as pltpu


def _sublane_multiple(dtype):
    """Row-tile granularity: sub-32-bit dtypes pack along sublanes."""
    return max(8, 32 // jnp.dtype(dtype).itemsize)  # f32->8, bf16->16, i8/fp8->32


def _vmem_limit_bytes():
    """Generation-aware scoped-VMEM limit (v5e/v6e: 128 MiB phys, v7x: 64 MiB)."""
    try:
        cap = int(pltpu.get_tpu_info().vmem_capacity_bytes)
    except Exception:
        cap = 64 * 1024 * 1024  # conservative fallback (v7x per-chip VMEM)
    return min(cap // 2, 64 * 1024 * 1024)


def _choose_tile_rows(n, c, dtype, vmem_limit):
    """Largest sublane-multiple row tile whose in-kernel footprint fits VMEM.

    Budget per logits row: 2x double-buffered native input plus ~4 live
    full-tile f32 temporaries (upcast/shifted, exp, class-iota, one-hot select).
    """
    itemsize = jnp.dtype(dtype).itemsize
    sub = _sublane_multiple(dtype)
    budget = (vmem_limit * 3) // 4                       # leave pipeline headroom
    per_row_bytes = c * (2 * itemsize + 4 * 4)
    tn = int((budget // max(1, per_row_bytes)) // sub * sub)
    tn = max(tn, sub)
    return min(tn, n)       # full-dim block is exempt from the sublane rule


def _ce_kernel(pred_ref, tgt_ref, sum_ref, flag_ref, *,
               n_total, tile_rows, tiles_per_part):
    """One row-tile of the cross-entropy reduction.

    pred_ref: (TN, C) logits (native dtype), tgt_ref: (TN, 1) int32 class ids.
    sum_ref / flag_ref: (1, 8, 128) f32 per-partition partial outputs, resident
    across the inner "arbitrary" axis (accumulated in place, no scratch).
    """
    p = pl.program_id(0)      # "parallel" batch partition (megacore on v7x)
    i = pl.program_id(1)      # "arbitrary" reduction over this partition's tiles

    @pl.when(i == 0)
    def _init():
        sum_ref[...] = jnp.zeros_like(sum_ref)
        flag_ref[...] = jnp.zeros_like(flag_ref)

    logits = pred_ref[...].astype(jnp.float32)           # single in-kernel upcast
    tgt = tgt_ref[...]                                   # (TN, 1) int32
    rows, c = logits.shape

    # Validity from the *logical* tile id: padded rows of the last real tile
    # and clamped duplicate steps both get logical row ids >= n -> masked out.
    lin_tile = p * tiles_per_part + i
    row_ids = lin_tile * tile_rows + jax.lax.broadcasted_iota(jnp.int32, (rows, 1), 0)
    valid = row_ids < n_total                             # (TN, 1) bool

    # Numerically stable CE.  Lane reductions go to the otherwise-idle MXU as
    # (TN,C)@(C,1) dots; per_row = log(sum exp(shifted)) - shifted[target].
    m = jnp.max(logits, axis=-1, keepdims=True)           # XLU
    shifted = logits - m
    e = jnp.exp(shifted)                                   # EUP

    ones = jnp.ones((c, 1), jnp.float32)
    sum_e = jnp.dot(e, ones, preferred_element_type=jnp.float32)              # (TN,1)
    cls_ids = jax.lax.broadcasted_iota(jnp.int32, (rows, c), 1)
    tgt_shift = jnp.dot(jnp.where(cls_ids == tgt, shifted, 0.0), ones,
                        preferred_element_type=jnp.float32)                   # (TN,1)

    per_row = jnp.where(valid, jnp.log(sum_e) - tgt_shift, 0.0)
    # TODO(synk): for extremely large N, accumulate per-row partials in a
    # lane-spread f32 vector before the scalar reduce for extra precision.
    tile_sum = jnp.sum(per_row)
    tile_flag = jnp.max(jnp.where(valid & (tgt > 0), 1.0, 0.0))

    sum_ref[...] = sum_ref[...] + jnp.broadcast_to(tile_sum, sum_ref.shape)
    flag_ref[...] = jnp.maximum(flag_ref[...],
                                jnp.broadcast_to(tile_flag, flag_ref.shape))


def custom_cross_entropy_loss(predictions, targets, *, tile_rows=None,
                              num_parts=None):
    """predictions: [N, C] logits (native float dtype); targets: [N] class ids.
    Returns a scalar f32 loss matching CustomCrossEntropyLoss.forward."""
    n, c = predictions.shape
    tgt2d = targets.astype(jnp.int32).reshape(n, 1)

    vmem_limit = _vmem_limit_bytes()
    tn = tile_rows if tile_rows is not None else _choose_tile_rows(
        n, c, predictions.dtype, vmem_limit)
    tn = min(tn, n)

    total_tiles = pl.cdiv(n, tn)
    if num_parts is None:
        num_parts = 2 if total_tiles >= 2 else 1          # engage both TCs on v7x
    tiles_per_part = pl.cdiv(total_tiles, num_parts)

    def row_block(pi, ii):
        # Clamp so a short partition's trailing step re-reads the last real
        # tile (kernel masks it out) instead of issuing an out-of-bounds DMA.
        return (jnp.minimum(pi * tiles_per_part + ii, total_tiles - 1), 0)

    kernel = functools.partial(_ce_kernel, n_total=n, tile_rows=tn,
                               tiles_per_part=tiles_per_part)

    psum, pflag = pl.pallas_call(
        kernel,
        out_shape=(jax.ShapeDtypeStruct((num_parts, 8, 128), jnp.float32),
                   jax.ShapeDtypeStruct((num_parts, 8, 128), jnp.float32)),
        grid=(num_parts, tiles_per_part),
        in_specs=[
            pl.BlockSpec((tn, c), row_block),              # logits row tile
            pl.BlockSpec((tn, 1), row_block),              # target ids row tile
        ],
        out_specs=(
            pl.BlockSpec((1, 8, 128), lambda pi, ii: (pi, 0, 0)),
            pl.BlockSpec((1, 8, 128), lambda pi, ii: (pi, 0, 0)),
        ),
        compiler_params=pltpu.CompilerParams(
            dimension_semantics=("parallel", "arbitrary"),
            vmem_limit_bytes=vmem_limit,
        ),
    )(predictions, tgt2d)

    total = jnp.sum(psum[:, 0, 0])                         # one partial per part
    has_pos = jnp.max(pflag) > 0.0
    return jnp.where(has_pos, total / jnp.float32(n), jnp.float32(0.0))


def _reference(predictions, targets):
    logp = jax.nn.log_softmax(predictions.astype(jnp.float32), axis=-1)
    per_row = -jnp.take_along_axis(
        logp, targets.reshape(-1, 1).astype(jnp.int32), axis=-1)[:, 0]
    return jnp.where(jnp.any(targets > 0), jnp.mean(per_row), 0.0)


if __name__ == "__main__":
    key = jax.random.PRNGKey(0)
    k1, k2, k3, k4, k5, k6 = jax.random.split(key, 6)

    # Case 1: small f32, single tile, single partition.
    N1, C1 = 8, 32
    p1 = jax.random.normal(k1, (N1, C1), dtype=jnp.float32)
    t1 = jax.random.randint(k2, (N1,), 0, C1, dtype=jnp.int32)
    l1 = custom_cross_entropy_loss(p1, t1)
    jax.block_until_ready(l1)
    r1 = _reference(p1, t1)
    assert jnp.allclose(l1, r1, atol=1e-5, rtol=1e-5), (l1, r1)

    # Case 2: bf16 logits, odd tile count + partial last tile -> exercises the
    # 2-way partition, clamped duplicate step, and padded-row masking.
    N2, C2 = 40, 128
    p2 = jax.random.normal(k3, (N2, C2), dtype=jnp.float32).astype(jnp.bfloat16)
    t2 = jax.random.randint(k4, (N2,), 0, C2, dtype=jnp.int32)
    l2 = custom_cross_entropy_loss(p2, t2, tile_rows=16)   # bf16 sublane pack = 16
    jax.block_until_ready(l2)
    r2 = _reference(p2, t2)
    assert jnp.allclose(l2, r2, atol=1e-4, rtol=1e-4), (l2, r2)

    # Case 3: f32, even multi-tile split across both partitions.
    N3, C3 = 64, 256
    p3 = jax.random.normal(k5, (N3, C3), dtype=jnp.float32)
    t3 = jax.random.randint(k6, (N3,), 0, C3, dtype=jnp.int32)
    l3 = custom_cross_entropy_loss(p3, t3, tile_rows=16)
    jax.block_until_ready(l3)
    r3 = _reference(p3, t3)
    assert jnp.allclose(l3, r3, atol=1e-5, rtol=1e-5), (l3, r3)

    # Case 4: the "no positive targets" branch returns exactly 0.
    l0 = custom_cross_entropy_loss(p1, jnp.zeros((N1,), dtype=jnp.int32))
    jax.block_until_ready(l0)
    assert jnp.allclose(l0, 0.0), l0

    print("KERNEL_OK")
</pallas_src>

<mosaic_0001>
module attributes {stable_mosaic.version = 11 : i64} {
  func.func @_ce_kernel(%arg0: i32, %arg1: i32, %arg2: memref<8x32xf32, #tpu.memory_space<vmem>>, %arg3: memref<8x1xi32, #tpu.memory_space<vmem>>, %arg4: memref<1x8x128xf32, #tpu.memory_space<vmem>>, %arg5: memref<1x8x128xf32, #tpu.memory_space<vmem>>) attributes {dimension_semantics = [#tpu.dimension_semantics<parallel>, #tpu.dimension_semantics<arbitrary>], iteration_bounds = array<i64: 1, 1>, scalar_prefetch = 0 : i64, scratch_operands = 0 : i64, tpu.core_type = #tpu.core_type<tc>, window_params = [{transform_indices = @transform_0, window_bounds = array<i64: 8, 32>}, {transform_indices = @transform_1, window_bounds = array<i64: 8, 1>}, {transform_indices = @transform_2, window_bounds = array<i64: 1, 8, 128>}, {transform_indices = @transform_3, window_bounds = array<i64: 1, 8, 128>}]} {
    %c0_i32 = arith.constant 0 : i32
    %0 = arith.cmpi eq, %arg1, %c0_i32 : i32
    %1 = arith.extui %0 : i1 to i32
    %c0_i32_0 = arith.constant 0 : i32
    %2 = arith.cmpi ne, %1, %c0_i32_0 : i32
    scf.if %2 {
      %cst_27 = arith.constant 0.000000e+00 : f32
      %52 = vector.broadcast %cst_27 : f32 to vector<1x8x128xf32>
      %c0_28 = arith.constant 0 : index
      %c0_29 = arith.constant 0 : index
      %c0_30 = arith.constant 0 : index
      %53 = vector.load %arg4[%c0_28, %c0_29, %c0_30] : memref<1x8x128xf32, #tpu.memory_space<vmem>>, vector<1x8x128xf32>
      tpu.vector_store %arg4[%c0_28, %c0_29, %c0_30], %52 {strides = array<i32>} : memref<1x8x128xf32, #tpu.memory_space<vmem>>, vector<1x8x128xf32>,
      %cst_31 = arith.constant 0.000000e+00 : f32
      %54 = vector.broadcast %cst_31 : f32 to vector<1x8x128xf32>
      %c0_32 = arith.constant 0 : index
      %c0_33 = arith.constant 0 : index
      %c0_34 = arith.constant 0 : index
      %55 = vector.load %arg5[%c0_32, %c0_33, %c0_34] : memref<1x8x128xf32, #tpu.memory_space<vmem>>, vector<1x8x128xf32>
      tpu.vector_store %arg5[%c0_32, %c0_33, %c0_34], %54 {strides = array<i32>} : memref<1x8x128xf32, #tpu.memory_space<vmem>>, vector<1x8x128xf32>,
    } else {
    }
    %c0 = arith.constant 0 : index
    %c0_1 = arith.constant 0 : index
    %3 = vector.load %arg2[%c0, %c0_1] : memref<8x32xf32, #tpu.memory_space<vmem>>, vector<8x32xf32>
    %c0_2 = arith.constant 0 : index
    %c0_3 = arith.constant 0 : index
    %4 = vector.load %arg3[%c0_2, %c0_3] : memref<8x1xi32, #tpu.memory_space<vmem>>, vector<8x1xi32>
    %c1_i32 = arith.constant 1 : i32
    %5 = arith.muli %arg0, %c1_i32 : i32
    %6 = arith.addi %5, %arg1 : i32
    %c8_i32 = arith.constant 8 : i32
    %7 = arith.muli %6, %c8_i32 : i32
    %8 = tpu.iota {dimensions = array<i32: 0>} : vector<8x1xi32>
    %9 = vector.broadcast %7 : i32 to vector<8x1xi32>
    %10 = arith.addi %9, %8 : vector<8x1xi32>
    %c8_i32_4 = arith.constant 8 : i32
    %11 = vector.broadcast %c8_i32_4 : i32 to vector<8x1xi32>
    %12 = arith.cmpi slt, %10, %11 : vector<8x1xi32>
    %cst = arith.constant dense<0xFF800000> : vector<8xf32>
    %13 = vector.multi_reduction <maximumf>, %3, %cst [1] : vector<8x32xf32> to vector<8xf32>
    %14 = vector.shape_cast %13 : vector<8xf32> to vector<8x1xf32>
    %15 = vector.broadcast %14 : vector<8x1xf32> to vector<8x32xf32>
    %16 = arith.subf %3, %15 : vector<8x32xf32>
    %17 = math.exp %16 : vector<8x32xf32>
    %cst_5 = arith.constant 1.000000e+00 : f32
    %18 = vector.broadcast %cst_5 : f32 to vector<32x1xf32>
    %cst_6 = arith.constant dense<0.000000e+00> : vector<8x1xf32>
    %19 = tpu.matmul %17, %18, %cst_6 {dimension_numbers = #tpu.dot_dimension_numbers<[1], [0], [0], [1], [0, 0, 1, 1], [], []>} : vector<8x32xf32>, vector<32x1xf32>, vector<8x1xf32> -> vector<8x1xf32>
    %20 = tpu.iota {dimensions = array<i32: 1>} : vector<8x32xi32>
    %21 = vector.broadcast %4 : vector<8x1xi32> to vector<8x32xi32>
    %22 = arith.cmpi eq, %20, %21 : vector<8x32xi32>
    %cst_7 = arith.constant 0.000000e+00 : f32
    %23 = vector.broadcast %cst_7 : f32 to vector<8x32xf32>
    %24 = arith.select %22, %16, %23 : vector<8x32xi1>, vector<8x32xf32>
    %cst_8 = arith.constant dense<0.000000e+00> : vector<8x1xf32>
    %25 = tpu.matmul %24, %18, %cst_8 {dimension_numbers = #tpu.dot_dimension_numbers<[1], [0], [0], [1], [0, 0, 1, 1], [], []>} : vector<8x32xf32>, vector<32x1xf32>, vector<8x1xf32> -> vector<8x1xf32>
    %26 = math.log %19 : vector<8x1xf32>
    %27 = arith.subf %26, %25 : vector<8x1xf32>
    %cst_9 = arith.constant 0.000000e+00 : f32
    %28 = vector.broadcast %cst_9 : f32 to vector<8x1xf32>
    %29 = arith.select %12, %27, %28 : vector<8x1xi1>, vector<8x1xf32>
    %30 = vector.shape_cast %29 : vector<8x1xf32> to vector<1x8x1xf32>
    %cst_10 = arith.constant dense<0.000000e+00> : vector<1xf32>
    %31 = vector.multi_reduction <add>, %30, %cst_10 [1, 2] : vector<1x8x1xf32> to vector<1xf32>
    %32 = vector.shape_cast %31 : vector<1xf32> to vector<1x1x1xf32>
    %33 = vector.extract %32[0, 0, 0] : f32 from vector<1x1x1xf32>
    %c0_i32_11 = arith.constant 0 : i32
    %34 = vector.broadcast %c0_i32_11 : i32 to vector<8x1xi32>
    %35 = arith.cmpi sgt, %4, %34 : vector<8x1xi32>
    %36 = arith.andi %12, %35 : vector<8x1xi1>
    %cst_12 = arith.constant 1.000000e+00 : f32
    %cst_13 = arith.constant 0.000000e+00 : f32
    %37 = vector.broadcast %cst_12 : f32 to vector<8x1xf32>
    %38 = vector.broadcast %cst_13 : f32 to vector<8x1xf32>
    %39 = arith.select %36, %37, %38 : vector<8x1xi1>, vector<8x1xf32>
    %40 = vector.shape_cast %39 : vector<8x1xf32> to vector<1x8x1xf32>
    %cst_14 = arith.constant dense<0xFF800000> : vector<1xf32>
    %41 = vector.multi_reduction <maximumf>, %40, %cst_14 [1, 2] : vector<1x8x1xf32> to vector<1xf32>
    %42 = vector.shape_cast %41 : vector<1xf32> to vector<1x1x1xf32>
    %43 = vector.extract %42[0, 0, 0] : f32 from vector<1x1x1xf32>
    %c0_15 = arith.constant 0 : index
    %c0_16 = arith.constant 0 : index
    %c0_17 = arith.constant 0 : index
    %44 = vector.load %arg4[%c0_15, %c0_16, %c0_17] : memref<1x8x128xf32, #tpu.memory_space<vmem>>, vector<1x8x128xf32>
    %45 = vector.broadcast %33 : f32 to vector<1x8x128xf32>
    %46 = arith.addf %44, %45 : vector<1x8x128xf32>
    %c0_18 = arith.constant 0 : index
    %c0_19 = arith.constant 0 : index
    %c0_20 = arith.constant 0 : index
    %47 = vector.load %arg4[%c0_18, %c0_19, %c0_20] : memref<1x8x128xf32, #tpu.memory_space<vmem>>, vector<1x8x128xf32>
    tpu.vector_store %arg4[%c0_18, %c0_19, %c0_20], %46 {strides = array<i32>} : memref<1x8x128xf32, #tpu.memory_space<vmem>>, vector<1x8x128xf32>,
    %c0_21 = arith.constant 0 : index
    %c0_22 = arith.constant 0 : index
    %c0_23 = arith.constant 0 : index
    %48 = vector.load %arg5[%c0_21, %c0_22, %c0_23] : memref<1x8x128xf32, #tpu.memory_space<vmem>>, vector<1x8x128xf32>
    %49 = vector.broadcast %43 : f32 to vector<1x8x128xf32>
    %50 = arith.maximumf %48, %49 : vector<1x8x128xf32>
    %c0_24 = arith.constant 0 : index
    %c0_25 = arith.constant 0 : index
    %c0_26 = arith.constant 0 : index
    %51 = vector.load %arg5[%c0_24, %c0_25, %c0_26] : memref<1x8x128xf32, #tpu.memory_space<vmem>>, vector<1x8x128xf32>
    tpu.vector_store %arg5[%c0_24, %c0_25, %c0_26], %50 {strides = array<i32>} : memref<1x8x128xf32, #tpu.memory_space<vmem>>, vector<1x8x128xf32>,
    return
  }
  func.func @transform_0(%arg0: i32, %arg1: i32) -> (i32, i32) {
    %c1_i32 = arith.constant 1 : i32
    %0 = arith.muli %arg0, %c1_i32 : i32
    %1 = arith.addi %0, %arg1 : i32
    %c0_i32 = arith.constant 0 : i32
    %2 = arith.minsi %1, %c0_i32 : i32
    %c0_i32_0 = arith.constant 0 : i32
    %c0_i32_1 = arith.constant 0 : i32
    return %2, %c0_i32_0 : i32, i32
  }
  func.func @transform_1(%arg0: i32, %arg1: i32) -> (i32, i32) {
    %c1_i32 = arith.constant 1 : i32
    %0 = arith.muli %arg0, %c1_i32 : i32
    %1 = arith.addi %0, %arg1 : i32
    %c0_i32 = arith.constant 0 : i32
    %2 = arith.minsi %1, %c0_i32 : i32
    %c0_i32_0 = arith.constant 0 : i32
    %c0_i32_1 = arith.constant 0 : i32
    return %2, %c0_i32_0 : i32, i32
  }
  func.func @transform_2(%arg0: i32, %arg1: i32) -> (i32, i32, i32) {
    %c0_i32 = arith.constant 0 : i32
    %c0_i32_0 = arith.constant 0 : i32
    %c0_i32_1 = arith.constant 0 : i32
    return %arg0, %c0_i32, %c0_i32_0 : i32, i32, i32
  }
  func.func @transform_3(%arg0: i32, %arg1: i32) -> (i32, i32, i32) {
    %c0_i32 = arith.constant 0 : i32
    %c0_i32_0 = arith.constant 0 : i32
    %c0_i32_1 = arith.constant 0 : i32
    return %arg0, %c0_i32, %c0_i32_0 : i32, i32, i32
  }
}

</mosaic_0001>

<llo_original>
// kernel: tpu_custom_call.1
$region0: #{tpu_custom_call.1}
  #allocation0 [shape = 'u32[]', space=smem, size = 0x4, offset = 0x4, fixed_abs, tag = 'smem constant byte address 0x4 - core index']
  #allocation1 [shape = 'u32[144,128]{1,0:T(1,128)}', space=vmem, size = 0x12000, scoped, tag = 'internal scratch']
  %s0 = inlined_call_operand.vmem [shape: f32[8,32], index: 0, kind: input, shape index: {}]
  %s1 = inlined_call_operand.vmem [shape: s32[8,1], index: 1, kind: input, shape index: {}]
  %s2 = inlined_call_operand.hbm [shape: f32[1,8,128], index: 2, kind: output, shape index: {0}]
  %s3 = inlined_call_operand.hbm [shape: f32[1,8,128], index: 3, kind: output, shape index: {1}]
  %4 = xla_tuple %s2, %s3
  %s5 = sld [smem:[#allocation0]]
  $region30: #{tpu_custom_call.1} parent=0
    _
  %s7 = ssub.s32 1, %s5
  %s8 = scalar_select 0, %s7, %s5
  $region1: #{tpu_custom_call.1} parent=0
    #allocation2 [shape = 'u8[4096]{0}', space=vmem, size = 0x1000, scoped, tag = 'output window, operand 0, single buffered']
    #allocation3 [shape = 's32[1]{0}', space=sflag, size = 0x4, scoped, tag = 'scoped memory for tpu_custom_call.1']
    #allocation4 [shape = 'u8[4096]{0}', space=vmem, size = 0x1000, scoped, tag = 'output window, operand 1, single buffered']
    #allocation5 [shape = 's32[1]{0}', space=sflag, size = 0x4, scoped, tag = 'scoped memory for tpu_custom_call.1']
    %9 = vsyncpa [#allocation3], 0
    %10 = vsyncpa [#allocation5], 0
    // Predicated region
    $region2: #{tpu_custom_call.1} parent=1 // pred_check
      _
    $region3: #{tpu_custom_call.1} parent=1 // pred_check_branch
      %12 = sbr.rel (0) target = $region5
    $region4: #{tpu_custom_call.1} parent=1 // pred_region
      %s13 = sadd.s32 0, 0
      %p14 = scmp.lt.s32.totalorder %s13, 0
      %s15 = scalar_select %p14, %s13, 0
      %p16 = scmp.lt.s32.totalorder %s15, 0
      %s17 = scalar_select %p16, %s15, 0
      %s18 = smul.addr %s17, 8
      %s19 = scalar_lea.vmem %s0, %s18
      %s20 = sadd.s32 0, 0
      %p21 = scmp.lt.s32.totalorder %s20, 0
      %s22 = scalar_select %p21, %s20, 0
    $region5: #{tpu_custom_call.1} parent=1 // pred_fallthru
      _
    // Predicated region
    $region6: #{tpu_custom_call.1} parent=1 // pred_check
      _
    $region7: #{tpu_custom_call.1} parent=1 // pred_check_branch
      %24 = sbr.rel (0) target = $region9
    $region8: #{tpu_custom_call.1} parent=1 // pred_region
      %s25 = sadd.s32 0, 0
      %p26 = scmp.lt.s32.totalorder %s25, 0
      %s27 = scalar_select %p26, %s25, 0
      %p28 = scmp.lt.s32.totalorder %s27, 0
      %s29 = scalar_select %p28, %s27, 0
      %s30 = smul.addr %s29, 8
      %s31 = scalar_lea.vmem %s1, %s30
      %s32 = sadd.s32 0, 0
      %p33 = scmp.lt.s32.totalorder %s32, 0
      %s34 = scalar_select %p33, %s32, 0
    $region9: #{tpu_custom_call.1} parent=1 // pred_fallthru
      _
    %s35 = sadd.s32 0, 0
    %p36 = scmp.lt.s32.totalorder %s35, 0
    %s37 = scalar_select %p36, %s35, 0
    %p38 = scmp.lt.s32.totalorder %s37, 0
    %s39 = scalar_select %p38, %s37, 0
    %s40 = smul.addr %s39, 8
    %s41 = scalar_lea.vmem %s0, %s40
    %s42 = sadd.s32 0, 0
    %p43 = scmp.lt.s32.totalorder %s42, 0
    %s44 = scalar_select %p43, %s42, 0
    %p45 = scmp.lt.s32.totalorder %s44, 0
    %s46 = scalar_select %p45, %s44, 0
    %s47 = smul.addr %s46, 8
    %s48 = scalar_lea.vmem %s1, %s47
    %s49 = sadd.s32 0, 0
    %p50 = scmp.lt.s32.totalorder %s49, 0
    %s51 = scalar_select %p50, %s49, 0
    %p52 = scmp.lt.s32.totalorder %s51, 0
    %s53 = scalar_select %p52, %s51, 0
    %s54 = smul.addr %s53, 8
    %s55 = scalar_lea.vmem %s0, %s54
    %s56 = sadd.s32 0, 0
    %p57 = scmp.lt.s32.totalorder %s56, 0
    %s58 = scalar_select %p57, %s56, 0
    %s59 = sadd.s32 0, 0
    %p60 = scmp.lt.s32.totalorder %s59, 0
    %s61 = scalar_select %p60, %s59, 0
    %p62 = scmp.lt.s32.totalorder %s61, 0
    %s63 = scalar_select %p62, %s61, 0
    %s64 = smul.addr %s63, 8
    %s65 = scalar_lea.vmem %s1, %s64
    %s66 = sadd.s32 0, 0
    %p67 = scmp.lt.s32.totalorder %s66, 0
    %s68 = scalar_select %p67, %s66, 0
    %p69 = scmp.eq.s32.totalorder 0, 0
    // Predicated region
    $region10: #{tpu_custom_call.1} parent=1 // pred_check
      %p70 = pneg %p69
    $region11: #{tpu_custom_call.1} parent=1 // pred_check_branch
      %72 = sbr.rel (%p70) target = $region13
    $region12: #{tpu_custom_call.1} parent=1 // pred_region
      %73 = vst [vmem:[#allocation2] sm:$0xff] 0.0
      %74 = vst [vmem:[#allocation4] sm:$0xff] 0.0
    $region13: #{tpu_custom_call.1} parent=1 // pred_fallthru
      _
    %v75 = vld [vmem:[%s55] sm:$0xff]
    %v76 = vld [vmem:[%s65] sm:$0xff]
    %s77 = sadd.s32 0, 0
    %s78 = smul.u32 %s77, 8
    %v79 = vlaneseq
    %v80 = vshrl.u32 %v79, 7
    %v81 = vstv %s78
    %v82 = vadd.s32 %v81, %v80
    %vm83 = vcmp.lt.s32.totalorder %v82, 8
    %vm84 = vcmask 261120
    %v85 = vsel %vm84, %v75, -inf
    %86 = vmax.xlane.f32.xlu0 %v85
    %v87 = vpop.xlane.xlu0 %86
    %v88 = vsub.f32 %v75, %v87
    %v89 = vmul.f32 %v88, 1.442695
    %v90 = vpow.pop %v89
    %v92 = vsel %vm84, %v90, 0
    %94 = vmatprep.subr.mxu0 0.0
    %95 = vmatpush1.msra.mxu0 0.0
    %96 = vmatprep.subr.mxu0 0.0
    %97 = vmatpush1.msra.mxu0 0.0
    %98 = vmatprep.subr.mxu0 0.0
    %99 = vmatpush1.msra.mxu0 0.0
    %100 = vmatprep.subr.mxu0 0.0
    %101 = vmatpush1.msra.mxu0 0.0
    %102 = vmatprep.subr.mxu0 0.0
    %103 = vmatpush1.msra.mxu0 0.0
    %104 = vmatprep.subr.mxu0 0.0
    %105 = vmatpush1.msra.mxu0 0.0
    %106 = vmatprep.subr.mxu0 0.0
    %107 = vmatpush1.msra.mxu0 0.0
    %108 = vmatprep.subr.mxu0 0.0
    %109 = vmatpush1.msra.mxu0 0.0
    %110 = vmatprep.subr.mxu0 0.0
    %111 = vmatpush1.msra.mxu0 0.0
    %112 = vmatprep.subr.mxu0 0.0
    %113 = vmatpush1.msra.mxu0 0.0
    %114 = vmatprep.subr.mxu0 0.0
    %115 = vmatpush1.msra.mxu0 0.0
    %116 = vmatprep.subr.mxu0 0.0
    %117 = vmatpush1.msra.mxu0 0.0
    %118 = vmatprep.subr.mxu0 0.0
    %119 = vmatpush1.msra.mxu0 1.0
    %120 = vmatprep.subr.mxu0 0.0
    %121 = vmatpush1.msra.mxu0 1.0
    %122 = vmatprep.subr.mxu0 0.0
    %123 = vmatpush1.msra.mxu0 1.0
    %124 = vmatprep.subr.mxu0 0.0
    %125 = vmatpush1.msra.mxu0 1.0
    %126 = vmatprep.subr.mxu0 0.0
    %127 = vmatpush2.msra.mxu0 0.0
    %128 = vmatprep.subr.mxu0 0.0
    %129 = vmatpush2.msra.mxu0 0.0
    %130 = vmatprep.subr.mxu0 0.0
    %131 = vmatpush2.msra.mxu0 0.0
    %132 = vmatprep.subr.mxu0 0.0
    %133 = vmatpush2.msra.mxu0 0.0
    %134 = vmatprep.subr.mxu0 0.0
    %135 = vmatpush2.msra.mxu0 0.0
    %136 = vmatprep.subr.mxu0 0.0
    %137 = vmatpush2.msra.mxu0 0.0
    %138 = vmatprep.subr.mxu0 0.0
    %139 = vmatpush2.msra.mxu0 0.0
    %140 = vmatprep.subr.mxu0 0.0
    %141 = vmatpush2.msra.mxu0 0.0
    %142 = vmatprep.subr.mxu0 0.0
    %143 = vmatpush2.msra.mxu0 0.0
    %144 = vmatprep.subr.mxu0 0.0
    %145 = vmatpush2.msra.mxu0 0.0
    %146 = vmatprep.subr.mxu0 0.0
    %147 = vmatpush2.msra.mxu0 0.0
    %148 = vmatprep.subr.mxu0 0.0
    %149 = vmatpush2.msra.mxu0 0.0
    %150 = vmatprep.subr.mxu0 0.0
    %151 = vmatpush2.msra.mxu0 0.0
    %152 = vmatprep.subr.mxu0 0.0
    %153 = vmatpush2.msra.mxu0 0.0
    %154 = vmatprep.subr.mxu0 0.0
    %155 = vmatpush2.msra.mxu0 0.0
    %156 = vmatprep.subr.mxu0 0.0
    %157 = vmatpush2.msra.mxu0 0.0
    %158 = vmatprep.mubr.f32.mxu0 0.0
    %159 = vmatmul.mubr.f32.gmra.mxu0 %v92
    %v160 = vpop.f32.mrf.mxu0
    %v161 = vadd.f32 0.0, %v160
    %v162 = vpop.f32.mrf.mxu0
    %163 = vdwg.mxu0
    %v164 = vlaneseq
    %v165 = vand.u32 %v164, 127
    %166 = vset.pattern.permute.xlu0 0
    %167 = vperm.xlu0 %166, %v76
    %v168 = vpop.permute.xlu0 %167
    %vm169 = vcmp.eq.s32.totalorder %v165, %v168
    %v170 = vsel %vm169, %v88, 0.0
    %v172 = vsel %vm84, %v170, 0
    %174 = vmatprep.subr.mxu0 0.0
    %175 = vmatpush1.msra.mxu0 0.0
    %176 = vmatprep.subr.mxu0 0.0
    %177 = vmatpush1.msra.mxu0 0.0
    %178 = vmatprep.subr.mxu0 0.0
    %179 = vmatpush1.msra.mxu0 0.0
    %180 = vmatprep.subr.mxu0 0.0
    %181 = vmatpush1.msra.mxu0 0.0
    %182 = vmatprep.subr.mxu0 0.0
    %183 = vmatpush1.msra.mxu0 0.0
    %184 = vmatprep.subr.mxu0 0.0
    %185 = vmatpush1.msra.mxu0 0.0
    %186 = vmatprep.subr.mxu0 0.0
    %187 = vmatpush1.msra.mxu0 0.0
    %188 = vmatprep.subr.mxu0 0.0
    %189 = vmatpush1.msra.mxu0 0.0
    %190 = vmatprep.subr.mxu0 0.0
    %191 = vmatpush1.msra.mxu0 0.0
    %192 = vmatprep.subr.mxu0 0.0
    %193 = vmatpush1.msra.mxu0 0.0
    %194 = vmatprep.subr.mxu0 0.0
    %195 = vmatpush1.msra.mxu0 0.0
    %196 = vmatprep.subr.mxu0 0.0
    %197 = vmatpush1.msra.mxu0 0.0
    %198 = vmatprep.subr.mxu0 0.0
    %199 = vmatpush1.msra.mxu0 1.0
    %200 = vmatprep.subr.mxu0 0.0
    %201 = vmatpush1.msra.mxu0 1.0
    %202 = vmatprep.subr.mxu0 0.0
    %203 = vmatpush1.msra.mxu0 1.0
    %204 = vmatprep.subr.mxu0 0.0
    %205 = vmatpush1.msra.mxu0 1.0
    %206 = vmatprep.subr.mxu0 0.0
    %207 = vmatpush2.msra.mxu0 0.0
    %208 = vmatprep.subr.mxu0 0.0
    %209 = vmatpush2.msra.mxu0 0.0
    %210 = vmatprep.subr.mxu0 0.0
    %211 = vmatpush2.msra.mxu0 0.0
    %212 = vmatprep.subr.mxu0 0.0
    %213 = vmatpush2.msra.mxu0 0.0
    %214 = vmatprep.subr.mxu0 0.0
    %215 = vmatpush2.msra.mxu0 0.0
    %216 = vmatprep.subr.mxu0 0.0
    %217 = vmatpush2.msra.mxu0 0.0
    %218 = vmatprep.subr.mxu0 0.0
    %219 = vmatpush2.msra.mxu0 0.0
    %220 = vmatprep.subr.mxu0 0.0
    %221 = vmatpush2.msra.mxu0 0.0
    %222 = vmatprep.subr.mxu0 0.0
    %223 = vmatpush2.msra.mxu0 0.0
    %224 = vmatprep.subr.mxu0 0.0
    %225 = vmatpush2.msra.mxu0 0.0
    %226 = vmatprep.subr.mxu0 0.0
    %227 = vmatpush2.msra.mxu0 0.0
    %228 = vmatprep.subr.mxu0 0.0
    %229 = vmatpush2.msra.mxu0 0.0
    %230 = vmatprep.subr.mxu0 0.0
    %231 = vmatpush2.msra.mxu0 0.0
    %232 = vmatprep.subr.mxu0 0.0
    %233 = vmatpush2.msra.mxu0 0.0
    %234 = vmatprep.subr.mxu0 0.0
    %235 = vmatpush2.msra.mxu0 0.0
    %236 = vmatprep.subr.mxu0 0.0
    %237 = vmatpush2.msra.mxu0 0.0
    %238 = vmatprep.mubr.f32.mxu0 0.0
    %239 = vmatmul.mubr.f32.gmra.mxu0 %v172
    %v240 = vpop.f32.mrf.mxu0
    %v241 = vadd.f32 0.0, %v240
    %v242 = vpop.f32.mrf.mxu0
    %243 = vdwg.mxu0
    %v244 = vlog2.pop %v161
    %v245 = vmul.f32 %v244, 0.6931472
    %v246 = vsub.f32 %v245, %v241
    %v247 = vsel %vm83, %v246, 0.0
    %vm248 = vcmask 7168
    %v249 = vsel %vm248, %v247, 0.0
    %250 = vadd.xlane.f32.xlu0 %v249
    %v251 = vpop.xlane.xlu0 %250
    %v252 = vrot.slane %v251, 4
    %v253 = vadd.f32 %v251, %v252
    %v254 = vrot.slane %v253, 2
    %v255 = vadd.f32 %v253, %v254
    %v256 = vrot.slane %v255, 1
    %v257 = vadd.f32 %v255, %v256
    %s258 = vtos %v257
    %vm259 = vcmp.gt.s32.totalorder %v76, 0
    %vm260 = vmand %vm83, %vm259
    %v261 = vsel %vm260, 1.0, 0.0
    %v262 = vsel %vm248, %v261, -inf
    %263 = vmax.xlane.f32.xlu0 %v262
    %v264 = vpop.xlane.xlu0 %263
    %v265 = vrot.slane %v264, 4
    %v266 = vmax.f32 %v264, %v265
    %v267 = vrot.slane %v266, 2
    %v268 = vmax.f32 %v266, %v267
    %v269 = vrot.slane %v268, 1
    %v270 = vmax.f32 %v268, %v269
    %s271 = vtos %v270
    %v272 = vld [vmem:[#allocation2] sm:$0xff]
    %v273 = vstv %s258
    %v274 = vadd.f32 %v272, %v273
    %275 = vst [vmem:[#allocation2] sm:$0xff] %v274
    %v276 = vld [vmem:[#allocation4] sm:$0xff]
    %v277 = vstv %s271
    %v278 = vmax.f32 %v276, %v277
    %279 = vst [vmem:[#allocation4] sm:$0xff] %v278
    // Predicated region
    $region14: #{tpu_custom_call.1} parent=1 // pred_check
      _
    $region15: #{tpu_custom_call.1} parent=1 // pred_check_branch
      %281 = sbr.rel (0) target = $region17
    $region16: #{tpu_custom_call.1} parent=1 // pred_region
      %s283 = ssub.s32 128, 128
      %284 = vsyncadd [#allocation3], %s283
      %s286 = sshll.u32 [#allocation2], 4
      %s287 = int_to_ptr.vmem [resolvable:$true] %s286
      %289 = dma.vmem_to_hbm [thread:$0]  %s287, 128, %s2, [#allocation3]
    $region17: #{tpu_custom_call.1} parent=1 // pred_fallthru
      _
    // Predicated region
    $region18: #{tpu_custom_call.1} parent=1 // pred_check
      _
    $region19: #{tpu_custom_call.1} parent=1 // pred_check_branch
      %291 = sbr.rel (0) target = $region21
    $region20: #{tpu_custom_call.1} parent=1 // pred_region
      %s293 = ssub.s32 128, 128
      %294 = vsyncadd [#allocation5], %s293
      %s296 = sshll.u32 [#allocation4], 4
      %s297 = int_to_ptr.vmem [resolvable:$true] %s296
      %299 = dma.vmem_to_hbm [thread:$0]  %s297, 128, %s3, [#allocation5]
    $region21: #{tpu_custom_call.1} parent=1 // pred_fallthru
      _
    // Predicated region
    $region22: #{tpu_custom_call.1} parent=1 // pred_check
      _
    $region23: #{tpu_custom_call.1} parent=1 // pred_check_branch
      %301 = sbr.rel (0) target = $region25
    $region24: #{tpu_custom_call.1} parent=1 // pred_region
      %302 = dma.done [#allocation3], 128
    $region25: #{tpu_custom_call.1} parent=1 // pred_fallthru
      _
    // Predicated region
    $region26: #{tpu_custom_call.1} parent=1 // pred_check
      _
    $region27: #{tpu_custom_call.1} parent=1 // pred_check_branch
      %304 = sbr.rel (0) target = $region29
    $region28: #{tpu_custom_call.1} parent=1 // pred_region
      %305 = dma.done [#allocation5], 128
    $region29: #{tpu_custom_call.1} parent=1 // pred_fallthru
      _
    %306 = vsyncpa [#allocation3], 1
    %307 = vsyncpa [#allocation5], 1

</llo_original>
